<compile_context>
chip_gen: v5e
topology: v5e:2x2
jax: 0.10.0
libtpu: 0.0.40
codegen_flags: <defaults>
</compile_context>

<pallas_src>
import functools
import math

import jax
import jax.numpy as jnp
from jax.experimental import pallas as pl
from jax.experimental.pallas import tpu as pltpu

_LANE = 128
_SUBLANE = 8


def _round_up(x, m):
    return (x + m - 1) // m * m


def _dice_plus_kernel(pred_ref, target_ref, out_ref, tp_ref, fnfp_ref,
                      *, gamma, epsilon, hw, cw, needs_mask):
    # pred_ref / target_ref : (R, CW) tile of the flattened (N, HW) inputs
    # out_ref               : (R, 128) lane-dense per-plane loss slab
    # tp_ref / fnfp_ref     : (R, 1) f32 VMEM accumulators across the col axis
    k = pl.program_id(1)
    last = pl.num_programs(1) - 1

    @pl.when(k == 0)
    def _():
        tp_ref[...] = jnp.zeros_like(tp_ref)
        fnfp_ref[...] = jnp.zeros_like(fnfp_ref)

    x = pred_ref[...].astype(jnp.float32)
    # sigmoid(x) == 0.5*tanh(0.5*x)+0.5 : one EUP op instead of exp+reciprocal.
    p = 0.5 * jnp.tanh(0.5 * x) + 0.5
    p = jnp.clip(p, epsilon, 1.0 - epsilon)
    t = jnp.clip(target_ref[...].astype(jnp.float32), epsilon, 1.0 - epsilon)

    tp_e = t * p
    fn_b = t - tp_e          # == t * (1 - p)
    fp_b = p - tp_e          # == (1 - t) * p

    # gamma is a static Python float -> resolve the fast path at trace time.
    g = float(gamma)
    if g == 2.0:
        fn_e = fn_b * fn_b
        fp_e = fp_b * fp_b
    elif g == 1.0:
        fn_e, fp_e = fn_b, fp_b
    elif g.is_integer() and g > 1.0:
        fn_e, fp_e = fn_b, fp_b
        for _ in range(int(g) - 1):
            fn_e = fn_e * fn_b
            fp_e = fp_e * fp_b
    else:
        fn_e = fn_b ** g
        fp_e = fp_b ** g

    fnfp_e = fn_e + fp_e

    def _accumulate(tp_vals, fnfp_vals):
        tp_ref[...] += jnp.sum(tp_vals, axis=-1, keepdims=True)
        fnfp_ref[...] += jnp.sum(fnfp_vals, axis=-1, keepdims=True)

    if needs_mask:
        # Only the final column tile can contain out-of-range (garbage)
        # columns; interior tiles accumulate unmasked.
        @pl.when(k < last)
        def _():
            _accumulate(tp_e, fnfp_e)

        @pl.when(k == last)
        def _():
            col = jax.lax.broadcasted_iota(jnp.int32, tp_e.shape, 1) + k * cw
            valid = col < hw
            zero = jnp.zeros_like(tp_e)
            _accumulate(jnp.where(valid, tp_e, zero),
                        jnp.where(valid, fnfp_e, zero))
    else:
        _accumulate(tp_e, fnfp_e)

    @pl.when(k == last)
    def _():
        tp2 = 2.0 * tp_ref[...]
        dice = (tp2 + epsilon) / (tp2 + fnfp_ref[...] + epsilon)
        loss = 1.0 - dice                                   # (R, 1)
        out_ref[...] = jnp.broadcast_to(loss, out_ref.shape)


def _choose_tiles(N, HW, itemsize, vmem_cap):
    """Pick (r, cw) so 2 inputs x 2 pipeline buffers fit ~25% of VMEM."""
    budget_bytes = max(vmem_cap // 4, 4 * 1024 * 1024)
    budget_elems = budget_bytes // (2 * 2 * max(itemsize, 1))

    if HW <= budget_elems // _SUBLANE:
        # Whole plane fits per row: single column tile, many planes per step.
        cw = HW
        r = (budget_elems // max(HW, 1)) // _SUBLANE * _SUBLANE
        r = max(r, _SUBLANE)
        r = min(r, 4096)   # keep the (r,128) output/accumulator slabs small
    else:
        # Huge planes: split the spatial axis into a reduction grid axis.
        r = _SUBLANE
        cw = (budget_elems // _SUBLANE) // _LANE * _LANE
        cw = max(cw, _LANE)

    if N <= _SUBLANE:
        # Full-extent row block (allowed even if not a multiple of 8).
        r = N
    else:
        n8 = _round_up(N, _SUBLANE)
        r = min(r, n8)
        # Guarantee >=2 row tiles when there are enough rows so both v7x
        # TensorCores get work (the column axis is the reduction axis and
        # cannot carry the megacore split).
        if n8 >= 2 * _SUBLANE:
            r = min(r, max((n8 // 2) // _SUBLANE * _SUBLANE, _SUBLANE))
        r = max(r // _SUBLANE * _SUBLANE, _SUBLANE)
    return r, cw


def dice_plus_loss(pred, target, *, gamma=2.0, epsilon=1e-7, reduction="none"):
    """Pallas implementation of DicePlusLoss.forward for (B, C, *spatial) inputs."""
    assert pred.shape == target.shape
    assert pred.ndim >= 2, "expects (B, C, *spatial) inputs"
    B, C = pred.shape[:2]
    spatial_shape = pred.shape[2:]
    N = B * C
    HW = math.prod(spatial_shape) if spatial_shape else 1

    pred2 = pred.reshape(N, HW)
    target2 = target.reshape(N, HW)

    itemsize = max(pred2.dtype.itemsize, target2.dtype.itemsize)

    # Generation-aware VMEM budgets (v7x: 64 MiB/TC, v5e/v6e: 128 MiB).
    try:
        vmem_cap = int(pltpu.get_tpu_info().vmem_capacity_bytes)
    except Exception:
        vmem_cap = 64 * 1024 * 1024
    vmem_limit = int(min(vmem_cap * 3 // 4, 100 * 1024 * 1024))

    r, cw = _choose_tiles(N, HW, itemsize, vmem_cap)
    n_row = pl.cdiv(N, r)
    n_col = pl.cdiv(HW, cw)
    needs_mask = (n_col * cw) != HW

    kernel = functools.partial(
        _dice_plus_kernel,
        gamma=float(gamma), epsilon=float(epsilon),
        hw=HW, cw=cw, needs_mask=needs_mask,
    )

    in_spec = pl.BlockSpec((r, cw), lambda i, k: (i, k))
    out_spec = pl.BlockSpec((r, _LANE), lambda i, k: (i, 0))

    cost = pl.CostEstimate(
        flops=8 * N * HW,
        transcendentals=N * HW,
        bytes_accessed=N * HW * (pred2.dtype.itemsize + target2.dtype.itemsize)
        + N * _LANE * 4,
    )

    per_plane = pl.pallas_call(
        kernel,
        out_shape=jax.ShapeDtypeStruct((N, _LANE), jnp.float32),
        grid=(n_row, n_col),
        in_specs=[in_spec, in_spec],
        out_specs=out_spec,
        scratch_shapes=[pltpu.VMEM((r, 1), jnp.float32)] * 2,
        compiler_params=pltpu.CompilerParams(
            dimension_semantics=("parallel", "arbitrary"),
            vmem_limit_bytes=vmem_limit,
        ),
        cost_estimate=cost,
    )(pred2, target2)

    loss = per_plane[:, 0].reshape(B, C)                    # per-(b, c) dice loss

    if reduction == "mean":
        # mean over the expanded tensor == mean of the per-plane losses
        return jnp.mean(loss).astype(pred.dtype)
    if reduction == "sum":
        # sum over the expanded tensor == sum(per-plane) * prod(spatial)
        return (jnp.sum(loss) * float(HW)).astype(pred.dtype)
    # reduction == 'none': expand the per-plane scalar over the spatial dims
    loss = loss.reshape((B, C) + (1,) * len(spatial_shape))
    return jnp.broadcast_to(loss, pred.shape).astype(pred.dtype)


def _dice_plus_loss_ref(pred, target, *, gamma=2.0, epsilon=1e-7, reduction="none"):
    # pure-JAX reference mirroring the PyTorch module
    p = jax.nn.sigmoid(pred.astype(jnp.float32))
    p = jnp.clip(p, epsilon, 1.0 - epsilon)
    t = jnp.clip(target.astype(jnp.float32), epsilon, 1.0 - epsilon)
    spatial = tuple(range(2, pred.ndim))
    tp = jnp.sum(t * p, axis=spatial)
    fn = jnp.sum((t * (1.0 - p)) ** gamma, axis=spatial)
    fp = jnp.sum(((1.0 - t) * p) ** gamma, axis=spatial)
    dice = (2.0 * tp + epsilon) / (2.0 * tp + fn + fp + epsilon)
    loss = 1.0 - dice
    loss = loss.reshape(pred.shape[:2] + (1,) * len(spatial))
    full = jnp.broadcast_to(loss, pred.shape)
    if reduction == "mean":
        return jnp.mean(full)
    if reduction == "sum":
        return jnp.sum(full)
    return full


if __name__ == "__main__":
    key = jax.random.PRNGKey(0)
    k1, k2, k3, k4 = jax.random.split(key, 4)

    # NCHW case (matches the segmentation use-case)
    B, C, H, W = 2, 4, 16, 16
    pred = jax.random.normal(k1, (B, C, H, W), dtype=jnp.float32)
    target = (jax.random.uniform(k2, (B, C, H, W)) > 0.5).astype(jnp.float32)

    out = jax.block_until_ready(dice_plus_loss(pred, target))
    ref = _dice_plus_loss_ref(pred, target)
    assert out.shape == pred.shape
    assert jnp.allclose(out, ref, atol=1e-5, rtol=1e-5), "mismatch vs reference (none)"

    m = jax.block_until_ready(dice_plus_loss(pred, target, reduction="mean"))
    assert jnp.allclose(m, _dice_plus_loss_ref(pred, target, reduction="mean"),
                        atol=1e-5, rtol=1e-5), "mismatch vs reference (mean)"

    s = jax.block_until_ready(dice_plus_loss(pred, target, reduction="sum"))
    assert jnp.allclose(s, _dice_plus_loss_ref(pred, target, reduction="sum"),
                        atol=1e-4, rtol=1e-4), "mismatch vs reference (sum)"

    # 3-D spatial volume with N not a multiple of 8 (exercises full-extent row block)
    B2, C2 = 2, 3
    pred3 = jax.random.normal(k3, (B2, C2, 4, 6, 8), dtype=jnp.float32)
    target3 = (jax.random.uniform(k4, (B2, C2, 4, 6, 8)) > 0.5).astype(jnp.float32)
    out3 = jax.block_until_ready(dice_plus_loss(pred3, target3))
    assert jnp.allclose(out3, _dice_plus_loss_ref(pred3, target3),
                        atol=1e-5, rtol=1e-5), "mismatch vs reference (3D)"

    # bf16 inputs (exercises the dtype-aware tile budget)
    outb = jax.block_until_ready(
        dice_plus_loss(pred.astype(jnp.bfloat16), target.astype(jnp.bfloat16)))
    refb = _dice_plus_loss_ref(pred.astype(jnp.bfloat16), target.astype(jnp.bfloat16))
    assert jnp.allclose(outb.astype(jnp.float32), refb.astype(jnp.float32),
                        atol=1e-2, rtol=1e-2), "mismatch vs reference (bf16)"

    print("KERNEL_OK")
</pallas_src>

<mosaic_0001>
module attributes {stable_mosaic.version = 11 : i64} {
  func.func @_dice_plus_kernel(%arg0: i32, %arg1: i32, %arg2: memref<8x256xf32, #tpu.memory_space<vmem>>, %arg3: memref<8x256xf32, #tpu.memory_space<vmem>>, %arg4: memref<8x128xf32, #tpu.memory_space<vmem>>, %arg5: memref<8x1xf32, #tpu.memory_space<vmem>>, %arg6: memref<8x1xf32, #tpu.memory_space<vmem>>) attributes {dimension_semantics = [#tpu.dimension_semantics<parallel>, #tpu.dimension_semantics<arbitrary>], iteration_bounds = array<i64: 1, 1>, scalar_prefetch = 0 : i64, scratch_operands = 2 : i64, tpu.core_type = #tpu.core_type<tc>, window_params = [{transform_indices = @transform_0, window_bounds = array<i64: 8, 256>}, {transform_indices = @transform_1, window_bounds = array<i64: 8, 256>}, {transform_indices = @transform_2, window_bounds = array<i64: 8, 128>}]} {
    %c0_i32 = arith.constant 0 : i32
    %0 = arith.cmpi eq, %arg1, %c0_i32 : i32
    %1 = arith.extui %0 : i1 to i32
    %c0_i32_0 = arith.constant 0 : i32
    %2 = arith.cmpi ne, %1, %c0_i32_0 : i32
    scf.if %2 {
      %cst_22 = arith.constant 0.000000e+00 : f32
      %39 = vector.broadcast %cst_22 : f32 to vector<8x1xf32>
      %c0_23 = arith.constant 0 : index
      %c0_24 = arith.constant 0 : index
      %40 = vector.load %arg5[%c0_23, %c0_24] : memref<8x1xf32, #tpu.memory_space<vmem>>, vector<8x1xf32>
      tpu.vector_store %arg5[%c0_23, %c0_24], %39 {strides = array<i32>} : memref<8x1xf32, #tpu.memory_space<vmem>>, vector<8x1xf32>,
      %cst_25 = arith.constant 0.000000e+00 : f32
      %41 = vector.broadcast %cst_25 : f32 to vector<8x1xf32>
      %c0_26 = arith.constant 0 : index
      %c0_27 = arith.constant 0 : index
      %42 = vector.load %arg6[%c0_26, %c0_27] : memref<8x1xf32, #tpu.memory_space<vmem>>, vector<8x1xf32>
      tpu.vector_store %arg6[%c0_26, %c0_27], %41 {strides = array<i32>} : memref<8x1xf32, #tpu.memory_space<vmem>>, vector<8x1xf32>,
    } else {
    }
    %c0 = arith.constant 0 : index
    %c0_1 = arith.constant 0 : index
    %3 = vector.load %arg2[%c0, %c0_1] : memref<8x256xf32, #tpu.memory_space<vmem>>, vector<8x256xf32>
    %cst = arith.constant 5.000000e-01 : f32
    %4 = vector.broadcast %cst : f32 to vector<8x256xf32>
    %5 = arith.mulf %4, %3 : vector<8x256xf32>
    %6 = math.tanh %5 : vector<8x256xf32>
    %cst_2 = arith.constant 5.000000e-01 : f32
    %7 = vector.broadcast %cst_2 : f32 to vector<8x256xf32>
    %8 = arith.mulf %7, %6 : vector<8x256xf32>
    %cst_3 = arith.constant 5.000000e-01 : f32
    %9 = vector.broadcast %cst_3 : f32 to vector<8x256xf32>
    %10 = arith.addf %8, %9 : vector<8x256xf32>
    %cst_4 = arith.constant 1.000000e-07 : f32
    %cst_5 = arith.constant 0.99999988 : f32
    %11 = vector.broadcast %cst_4 : f32 to vector<8x256xf32>
    %12 = arith.maximumf %11, %10 : vector<8x256xf32>
    %13 = vector.broadcast %cst_5 : f32 to vector<8x256xf32>
    %14 = arith.minimumf %13, %12 : vector<8x256xf32>
    %c0_6 = arith.constant 0 : index
    %c0_7 = arith.constant 0 : index
    %15 = vector.load %arg3[%c0_6, %c0_7] : memref<8x256xf32, #tpu.memory_space<vmem>>, vector<8x256xf32>
    %cst_8 = arith.constant 1.000000e-07 : f32
    %cst_9 = arith.constant 0.99999988 : f32
    %16 = vector.broadcast %cst_8 : f32 to vector<8x256xf32>
    %17 = arith.maximumf %16, %15 : vector<8x256xf32>
    %18 = vector.broadcast %cst_9 : f32 to vector<8x256xf32>
    %19 = arith.minimumf %18, %17 : vector<8x256xf32>
    %20 = arith.mulf %19, %14 : vector<8x256xf32>
    %21 = arith.subf %19, %20 : vector<8x256xf32>
    %22 = arith.subf %14, %20 : vector<8x256xf32>
    %23 = arith.mulf %21, %21 : vector<8x256xf32>
    %24 = arith.mulf %22, %22 : vector<8x256xf32>
    %25 = arith.addf %23, %24 : vector<8x256xf32>
    %c0_10 = arith.constant 0 : index
    %c0_11 = arith.constant 0 : index
    %26 = vector.load %arg5[%c0_10, %c0_11] : memref<8x1xf32, #tpu.memory_space<vmem>>, vector<8x1xf32>
    %cst_12 = arith.constant dense<0.000000e+00> : vector<8xf32>
    %27 = vector.multi_reduction <add>, %20, %cst_12 [1] : vector<8x256xf32> to vector<8xf32>
    %28 = vector.shape_cast %27 : vector<8xf32> to vector<8x1xf32>
    %29 = arith.addf %26, %28 : vector<8x1xf32>
    %c0_13 = arith.constant 0 : index
    %c0_14 = arith.constant 0 : index
    %30 = vector.load %arg5[%c0_13, %c0_14] : memref<8x1xf32, #tpu.memory_space<vmem>>, vector<8x1xf32>
    tpu.vector_store %arg5[%c0_13, %c0_14], %29 {strides = array<i32>} : memref<8x1xf32, #tpu.memory_space<vmem>>, vector<8x1xf32>,
    %c0_15 = arith.constant 0 : index
    %c0_16 = arith.constant 0 : index
    %31 = vector.load %arg6[%c0_15, %c0_16] : memref<8x1xf32, #tpu.memory_space<vmem>>, vector<8x1xf32>
    %cst_17 = arith.constant dense<0.000000e+00> : vector<8xf32>
    %32 = vector.multi_reduction <add>, %25, %cst_17 [1] : vector<8x256xf32> to vector<8xf32>
    %33 = vector.shape_cast %32 : vector<8xf32> to vector<8x1xf32>
    %34 = arith.addf %31, %33 : vector<8x1xf32>
    %c0_18 = arith.constant 0 : index
    %c0_19 = arith.constant 0 : index
    %35 = vector.load %arg6[%c0_18, %c0_19] : memref<8x1xf32, #tpu.memory_space<vmem>>, vector<8x1xf32>
    tpu.vector_store %arg6[%c0_18, %c0_19], %34 {strides = array<i32>} : memref<8x1xf32, #tpu.memory_space<vmem>>, vector<8x1xf32>,
    %c0_i32_20 = arith.constant 0 : i32
    %36 = arith.cmpi eq, %arg1, %c0_i32_20 : i32
    %37 = arith.extui %36 : i1 to i32
    %c0_i32_21 = arith.constant 0 : i32
    %38 = arith.cmpi ne, %37, %c0_i32_21 : i32
    scf.if %38 {
      %c0_22 = arith.constant 0 : index
      %c0_23 = arith.constant 0 : index
      %39 = vector.load %arg5[%c0_22, %c0_23] : memref<8x1xf32, #tpu.memory_space<vmem>>, vector<8x1xf32>
      %cst_24 = arith.constant 2.000000e+00 : f32
      %40 = vector.broadcast %cst_24 : f32 to vector<8x1xf32>
      %41 = arith.mulf %40, %39 : vector<8x1xf32>
      %cst_25 = arith.constant 1.000000e-07 : f32
      %42 = vector.broadcast %cst_25 : f32 to vector<8x1xf32>
      %43 = arith.addf %41, %42 : vector<8x1xf32>
      %c0_26 = arith.constant 0 : index
      %c0_27 = arith.constant 0 : index
      %44 = vector.load %arg6[%c0_26, %c0_27] : memref<8x1xf32, #tpu.memory_space<vmem>>, vector<8x1xf32>
      %45 = arith.addf %41, %44 : vector<8x1xf32>
      %cst_28 = arith.constant 1.000000e-07 : f32
      %46 = vector.broadcast %cst_28 : f32 to vector<8x1xf32>
      %47 = arith.addf %45, %46 : vector<8x1xf32>
      %48 = arith.divf %43, %47 : vector<8x1xf32>
      %cst_29 = arith.constant 1.000000e+00 : f32
      %49 = vector.broadcast %cst_29 : f32 to vector<8x1xf32>
      %50 = arith.subf %49, %48 : vector<8x1xf32>
      %51 = vector.shape_cast %50 : vector<8x1xf32> to vector<8x1xf32>
      %52 = vector.broadcast %51 : vector<8x1xf32> to vector<8x128xf32>
      %c0_30 = arith.constant 0 : index
      %c0_31 = arith.constant 0 : index
      %53 = vector.load %arg4[%c0_30, %c0_31] : memref<8x128xf32, #tpu.memory_space<vmem>>, vector<8x128xf32>
      tpu.vector_store %arg4[%c0_30, %c0_31], %52 {strides = array<i32>} : memref<8x128xf32, #tpu.memory_space<vmem>>, vector<8x128xf32>,
    } else {
    }
    return
  }
  func.func @transform_0(%arg0: i32, %arg1: i32) -> (i32, i32) {
    %c0_i32 = arith.constant 0 : i32
    return %arg0, %arg1 : i32, i32
  }
  func.func @transform_1(%arg0: i32, %arg1: i32) -> (i32, i32) {
    %c0_i32 = arith.constant 0 : i32
    return %arg0, %arg1 : i32, i32
  }
  func.func @transform_2(%arg0: i32, %arg1: i32) -> (i32, i32) {
    %c0_i32 = arith.constant 0 : i32
    %c0_i32_0 = arith.constant 0 : i32
    return %arg0, %c0_i32 : i32, i32
  }
}

</mosaic_0001>

<llo_original>
// kernel: tpu_custom_call.1
$region0: #{tpu_custom_call.1}
  #allocation0 [shape = 'u32[]', space=smem, size = 0x4, offset = 0x4, fixed_abs, tag = 'smem constant byte address 0x4 - core index']
  #allocation1 [shape = 'u32[72,128]{1,0:T(1,128)}', space=vmem, size = 0x9000, scoped, tag = 'internal scratch']
  #allocation2 [shape = 'f32[8,1]{1,0:T(8,128)}', space=vmem, size = 0x1000, scoped, tag = 'scratch operand']
  #allocation3 [shape = 'f32[8,1]{1,0:T(8,128)}', space=vmem, size = 0x1000, scoped, tag = 'scratch operand']
  %s0 = inlined_call_operand.hbm [shape: f32[8,256], index: 0, kind: input, shape index: {}]
  %s1 = inlined_call_operand.hbm [shape: f32[8,256], index: 1, kind: input, shape index: {}]
  %s2 = inlined_call_operand.hbm [shape: f32[8,128], index: 2, kind: output, shape index: {}]
  %s3 = sld [smem:[#allocation0]]
  $region34: #{tpu_custom_call.1} parent=0
    _
  %s5 = ssub.s32 1, %s3
  %s6 = scalar_select 0, %s5, %s3
  $region1: #{tpu_custom_call.1} parent=0
    #allocation4 [shape = 'u8[8192]{0}', space=vmem, size = 0x2000, scoped, tag = 'input window, operand 0, single buffered']
    #allocation5 [shape = 's32[1]{0}', space=sflag, size = 0x4, scoped, tag = 'scoped memory for tpu_custom_call.1']
    #allocation6 [shape = 's32[1]{0}', space=sflag, size = 0x4, scoped, tag = 'scoped memory for tpu_custom_call.1']
    #allocation7 [shape = 'u8[8192]{0}', space=vmem, size = 0x2000, scoped, tag = 'input window, operand 1, single buffered']
    #allocation8 [shape = 's32[1]{0}', space=sflag, size = 0x4, scoped, tag = 'scoped memory for tpu_custom_call.1']
    #allocation9 [shape = 'u8[4096]{0}', space=vmem, size = 0x1000, scoped, tag = 'output window, operand 0, single buffered']
    %7 = vsyncpa [#allocation5], 0
    %8 = vsyncpa [#allocation8], 0
    %9 = vsyncpa [#allocation6], 0
    // Predicated region
    $region2: #{tpu_custom_call.1} parent=1 // pred_check
      _
    $region3: #{tpu_custom_call.1} parent=1 // pred_check_branch
      %11 = sbr.rel (0) target = $region5
    $region4: #{tpu_custom_call.1} parent=1 // pred_region
      %13 = vsyncadd [#allocation5], 0
      %s15 = sshll.u32 %s0, 4
      %s16 = int_to_ptr.hbm [resolvable:$true] %s15
      %s17 = sshll.u32 [#allocation4], 4
      %s18 = int_to_ptr.vmem [resolvable:$true] %s17
      %20 = dma.hbm_to_vmem [thread:$0]  %s16, 256, %s18, [#allocation5]
    $region5: #{tpu_custom_call.1} parent=1 // pred_fallthru
      _
    // Predicated region
    $region6: #{tpu_custom_call.1} parent=1 // pred_check
      _
    $region7: #{tpu_custom_call.1} parent=1 // pred_check_branch
      %22 = sbr.rel (0) target = $region9
    $region8: #{tpu_custom_call.1} parent=1 // pred_region
      %24 = vsyncadd [#allocation8], 0
      %s26 = sshll.u32 %s1, 4
      %s27 = int_to_ptr.hbm [resolvable:$true] %s26
      %s28 = sshll.u32 [#allocation7], 4
      %s29 = int_to_ptr.vmem [resolvable:$true] %s28
      %31 = dma.hbm_to_vmem [thread:$0]  %s27, 256, %s29, [#allocation8]
    $region9: #{tpu_custom_call.1} parent=1 // pred_fallthru
      _
    // Predicated region
    $region10: #{tpu_custom_call.1} parent=1 // pred_check
      _
    $region11: #{tpu_custom_call.1} parent=1 // pred_check_branch
      %33 = sbr.rel (0) target = $region13
    $region12: #{tpu_custom_call.1} parent=1 // pred_region
      %35 = dma.done [#allocation5], 256
    $region13: #{tpu_custom_call.1} parent=1 // pred_fallthru
      _
    // Predicated region
    $region14: #{tpu_custom_call.1} parent=1 // pred_check
      _
    $region15: #{tpu_custom_call.1} parent=1 // pred_check_branch
      %37 = sbr.rel (0) target = $region17
    $region16: #{tpu_custom_call.1} parent=1 // pred_region
      %39 = dma.done [#allocation8], 256
    $region17: #{tpu_custom_call.1} parent=1 // pred_fallthru
      _
    %p40 = scmp.eq.s32.totalorder 0, 0
    // Predicated region
    $region18: #{tpu_custom_call.1} parent=1 // pred_check
      %p41 = pneg %p40
    $region19: #{tpu_custom_call.1} parent=1 // pred_check_branch
      %43 = sbr.rel (%p41) target = $region21
    $region20: #{tpu_custom_call.1} parent=1 // pred_region
      %vm44 = vcmask 7168
      %45 = vst.msk [vmem:[#allocation2] sm:$0xff] %vm44, 0.0
      %46 = vst.msk [vmem:[#allocation3] sm:$0xff] %vm44, 0.0
    $region21: #{tpu_custom_call.1} parent=1 // pred_fallthru
      _
    %v47 = vld [vmem:[#allocation4] sm:$0xff]
    %v48 = vld [vmem:[#allocation4 + $0x8] sm:$0xff]
    %v49 = vmul.f32 %v47, 0.5
    %v50 = vmul.f32 %v48, 0.5
    %v51 = vtanh.pop %v49
    %v52 = vtanh.pop %v50
    %v53 = vmul.f32 %v51, 0.5
    %v54 = vmul.f32 %v52, 0.5
    %v55 = vadd.f32 %v53, 0.5
    %v56 = vadd.f32 %v54, 0.5
    %v57 = vmax.f32 %v55, 1e-07
    %v58 = vmax.f32 %v56, 1e-07
    %v59 = vmin.f32 %v57, 0.9999999
    %v60 = vmin.f32 %v58, 0.9999999
    %v61 = vld [vmem:[#allocation7] sm:$0xff]
    %v62 = vld [vmem:[#allocation7 + $0x8] sm:$0xff]
    %v63 = vmax.f32 %v61, 1e-07
    %v64 = vmax.f32 %v62, 1e-07
    %v65 = vmin.f32 %v63, 0.9999999
    %v66 = vmin.f32 %v64, 0.9999999
    %v67 = vmul.f32 %v65, %v59
    %v68 = vmul.f32 %v66, %v60
    %v69 = vsub.f32 %v65, %v67
    %v70 = vsub.f32 %v66, %v68
    %v71 = vsub.f32 %v59, %v67
    %v72 = vsub.f32 %v60, %v68
    %v73 = vmul.f32 %v69, %v69
    %v74 = vmul.f32 %v70, %v70
    %v75 = vmul.f32 %v71, %v71
    %v76 = vmul.f32 %v72, %v72
    %v77 = vadd.f32 %v73, %v75
    %v78 = vadd.f32 %v74, %v76
    %v79 = vld [vmem:[#allocation2] sm:$0xff]
    %v80 = vadd.f32 %v67, %v68
    %81 = vadd.xlane.f32.xlu0 %v80
    %v82 = vpop.xlane.xlu0 %81
    %v83 = vadd.f32 %v79, %v82
    %vm84 = vcmask 7168
    %85 = vst.msk [vmem:[#allocation2] sm:$0xff] %vm84, %v83
    %v86 = vld [vmem:[#allocation3] sm:$0xff]
    %v87 = vadd.f32 %v77, %v78
    %88 = vadd.xlane.f32.xlu0 %v87
    %v89 = vpop.xlane.xlu0 %88
    %v90 = vadd.f32 %v86, %v89
    %91 = vst.msk [vmem:[#allocation3] sm:$0xff] %vm84, %v90
    // Predicated region
    $region22: #{tpu_custom_call.1} parent=1 // pred_check
      %p92 = pneg %p40
    $region23: #{tpu_custom_call.1} parent=1 // pred_check_branch
      %94 = sbr.rel (%p92) target = $region25
    $region24: #{tpu_custom_call.1} parent=1 // pred_region
      %v95 = vld [vmem:[#allocation2] sm:$0xff]
      %v96 = vmul.f32 %v95, 2.0
      %v97 = vadd.f32 %v96, 1e-07
      %v98 = vld [vmem:[#allocation3] sm:$0xff]
      %v99 = vadd.f32 %v96, %v98
      %v100 = vadd.f32 %v99, 1e-07
      %v101 = vrcp.pop %v100
      %v102 = vmul.f32 %v100, %v101
      %v103 = vsub.f32 1.0, %v102
      %v104 = vmul.f32 %v101, %v103
      %v105 = vadd.f32 %v101, %v104
      %vm106 = vweird.f32 %v100
      %vm107 = vweird.f32 %v101
      %vm108 = vmor %vm106, %vm107
      %v109 = vsel %vm108, %v101, %v105
      %v110 = vand.u32 2147483647, %v100
      %vm111 = vcmp.eq.f32.partialorder %v110, 8.507059e+37
      %v112 = vand.u32 %v100, 2147483648
      %v113 = vor.u32 1.1754944e-38, %v112
      %v114 = vsel %vm111, %v113, %v109
      %v115 = vmul.f32 %v97, %v114
      %v116 = vsub.f32 1.0, %v115
      %118 = vset.pattern.permute.xlu0 0
      %119 = vperm.xlu0 %118, %v116
      %v120 = vpop.permute.xlu0 %119
      %122 = vst [vmem:[#allocation9] sm:$0xff] %v120
    $region25: #{tpu_custom_call.1} parent=1 // pred_fallthru
      _
    // Predicated region
    $region26: #{tpu_custom_call.1} parent=1 // pred_check
      _
    $region27: #{tpu_custom_call.1} parent=1 // pred_check_branch
      %124 = sbr.rel (0) target = $region29
    $region28: #{tpu_custom_call.1} parent=1 // pred_region
      %126 = vsyncadd [#allocation6], 0
      %s128 = sshll.u32 [#allocation9], 4
      %s129 = int_to_ptr.vmem [resolvable:$true] %s128
      %s130 = sshll.u32 %s2, 4
      %s131 = int_to_ptr.hbm [resolvable:$true] %s130
      %133 = dma.vmem_to_hbm [thread:$0]  %s129, 128, %s131, [#allocation6]
    $region29: #{tpu_custom_call.1} parent=1 // pred_fallthru
      _
    // Predicated region
    $region30: #{tpu_custom_call.1} parent=1 // pred_check
      _
    $region31: #{tpu_custom_call.1} parent=1 // pred_check_branch
      %135 = sbr.rel (0) target = $region33
    $region32: #{tpu_custom_call.1} parent=1 // pred_region
      %137 = dma.done [#allocation6], 128
    $region33: #{tpu_custom_call.1} parent=1 // pred_fallthru
      _
    %138 = vsyncpa [#allocation5], 1
    %139 = vsyncpa [#allocation8], 1
    %140 = vsyncpa [#allocation6], 1

</llo_original>
